<compile_context>
chip_gen: v5e
topology: v5e:2x2
jax: 0.10.0
libtpu: 0.0.40
codegen_flags: <defaults>
</compile_context>

<pallas_src>
import jax
import jax.numpy as jnp
from jax import lax
from jax.experimental import pallas as pl
from jax.experimental.pallas import tpu as pltpu


def _round_up(x: int, m: int) -> int:
    return (x + m - 1) // m * m


# ----------------------------------------------------------------------------
# Pallas kernel (one batch tile of TB rows per grid step)
# ----------------------------------------------------------------------------
def _make_neumf_kernel(num_layers: int):
    """Ref layout:
      [0] u_rows [TB, F+D] bf16   [1] i_rows [TB, F+D] bf16   (packed gmf|mlp rows)
      [2] W1u^T [O1, F+D] f32 (gmf cols zeroed)   [3] W1i^T [O1, F+D]   [4] b1 [O1, 1]
      then (W^T [out, in], b [out, 1]) for tower layers 2..L
      then wg [1, F+D] (mlp cols zeroed), wm [1, F], b_fc [1, 1]
      last ref = output [1, 1, TB]  (lane-dense scores row)
    """

    def kernel(*refs):
        f32 = jnp.float32
        u_ref, i_ref = refs[0], refs[1]
        w1u_ref, w1i_ref, b1_ref = refs[2], refs[3], refs[4]
        idx = 5

        # Upcast once; v5e has no bf16 VPU/EUP, so all elementwise work is f32.
        u = u_ref[...].astype(f32)                      # [TB, F+D]
        it = i_ref[...].astype(f32)                     # [TB, F+D]

        # ---- MLP tower layer 1, batch-on-lanes: contract the packed feature
        #      axis directly (A @ B^T form) -> [O1, TB].  The GMF columns of the
        #      weights are zero, so the packed rows need no slicing.
        dn_nt = (((1,), (1,)), ((), ()))
        h = lax.dot_general(w1u_ref[...], u, dn_nt, preferred_element_type=f32)
        h = h + lax.dot_general(w1i_ref[...], it, dn_nt, preferred_element_type=f32)
        h = jnp.maximum(h + b1_ref[...], 0.0)           # [O1, TB], bias [O1, 1]

        # ---- remaining tower layers: h = relu(W^T @ h + b), all [feat, TB]
        for _ in range(num_layers - 1):
            w_ref, b_ref = refs[idx], refs[idx + 1]
            idx += 2
            h = jnp.dot(w_ref[...], h, preferred_element_type=f32)
            h = jnp.maximum(h + b_ref[...], 0.0)

        wg_ref, wm_ref, bfc_ref = refs[idx], refs[idx + 1], refs[idx + 2]
        out_ref = refs[idx + 3]

        # ---- GMF branch + final 2F -> 1 projection, concat-free, lane-dense.
        # prod's MLP columns are garbage but contract against zeros in wg.
        prod = u * it                                                     # [TB, F+D]
        logit = lax.dot_general(wg_ref[...], prod, dn_nt,
                                preferred_element_type=f32)               # [1, TB]
        logit = logit + jnp.dot(wm_ref[...], h, preferred_element_type=f32)
        logit = logit + bfc_ref[...]                                      # + [1, 1]

        out_ref[...] = jax.nn.sigmoid(logit).reshape(out_ref.shape)       # [1, 1, TB]

    return kernel


# ----------------------------------------------------------------------------
# Tiling choice
# ----------------------------------------------------------------------------
def _choose_tiling(batch: int, max_tile_rows: int):
    """Returns (TB, num_tiles, B_pad).  TB multiple of 8 (sublane); lane-dense
    multiples of 256 once there are multiple tiles; >=2 tiles when B >= 1024 so
    the 'parallel' grid axis can shard across v7x's two TensorCores."""
    if batch < 1024:
        tb = _round_up(batch, 8)
        return tb, 1, tb
    nt = max(pl.cdiv(batch, max_tile_rows), 2)
    tb = _round_up(pl.cdiv(batch, nt), 256)
    return tb, nt, nt * tb


# ----------------------------------------------------------------------------
# Wrapper
# ----------------------------------------------------------------------------
def neumf_forward(u_rows, i_rows, mlp_params, fc_w, fc_b, num_factors,
                  *, tile_rows, num_tiles):
    """u_rows / i_rows: [num_tiles*tile_rows, F+D] packed gathered rows (bf16).
    mlp_params: list of (W [in, out], b [1, out]).  fc_w: [2F, 1], fc_b: [1, 1].
    Returns [num_tiles*tile_rows] f32 sigmoid scores."""
    f32 = jnp.float32
    B_pad, FD = u_rows.shape
    F = num_factors
    D = FD - F
    num_layers = len(mlp_params)

    # First tower layer: split W1 [2D, O1] into user/item halves, transpose to
    # [O1, D] and zero-pad the GMF columns so the packed [TB, F+D] rows can be
    # contracted without any in-kernel lane slicing.
    w1, b1 = mlp_params[0]
    o1 = w1.shape[1]
    zpad = jnp.zeros((o1, F), f32)
    w1u = jnp.concatenate([zpad, w1[:D].T.astype(f32)], axis=1)   # [O1, F+D]
    w1i = jnp.concatenate([zpad, w1[D:].T.astype(f32)], axis=1)   # [O1, F+D]
    flat_weights = [w1u, w1i, b1.reshape(-1, 1).astype(f32)]
    for w, b in mlp_params[1:]:
        flat_weights += [w.T.astype(f32), b.reshape(-1, 1).astype(f32)]
    # Final fc: split [2F, 1]; zero-pad the GMF half over the MLP columns of the
    # packed row so the GMF projection contracts the full [TB, F+D] product.
    wg = jnp.concatenate([fc_w[:F].reshape(1, F).astype(f32),
                          jnp.zeros((1, D), f32)], axis=1)        # [1, F+D]
    wm = fc_w[F:].reshape(1, F).astype(f32)                       # [1, F]
    flat_weights += [wg, wm, fc_b.reshape(1, 1).astype(f32)]

    # Batch inputs: tiled along the grid.  Weights: constant block index
    # (VMEM-resident, no re-DMA across grid steps).
    batch_spec = pl.BlockSpec((tile_rows, FD), lambda t: (t, 0))
    in_specs = [batch_spec, batch_spec]
    in_specs += [pl.BlockSpec(w.shape, lambda t: (0, 0)) for w in flat_weights]

    out = pl.pallas_call(
        _make_neumf_kernel(num_layers),
        out_shape=jax.ShapeDtypeStruct((num_tiles, 1, tile_rows), f32),
        grid=(num_tiles,),
        in_specs=in_specs,
        out_specs=pl.BlockSpec((1, 1, tile_rows), lambda t: (t, 0, 0)),
        compiler_params=pltpu.CompilerParams(
            # single axis, independent tiles -> shard across TCs on v7x
            dimension_semantics=("parallel",),
            # ~12 MiB/tile at TB=4096 bf16 inputs + f32 intermediates; 32 MiB
            # stays inside v7x's 64 MiB physical with double-buffer headroom.
            vmem_limit_bytes=32 * 1024 * 1024,
        ),
    )(u_rows, i_rows, *flat_weights)

    return out.reshape(num_tiles * tile_rows)


def neumf_apply(params, user, item, *, max_tile_rows: int = 4096):
    """NeuMF forward.  user/item: [B] int32 ids.  Returns [B] f32 scores."""
    F = params["num_factors"]
    B = user.shape[0]
    TB, num_tiles, B_pad = _choose_tiling(B, max_tile_rows)

    # Pad the cheap int32 index vectors (NOT the gathered activations), so the
    # gathered arrays come out already tile-aligned.
    if B_pad != B:
        user = jnp.pad(user, (0, B_pad - B))
        item = jnp.pad(item, (0, B_pad - B))

    # One gather per id: packed [gmf | mlp] bf16 rows.
    u_rows = params["user_table"][user]          # [B_pad, F+D] bf16
    i_rows = params["item_table"][item]          # [B_pad, F+D] bf16

    scores = neumf_forward(u_rows, i_rows, params["mlp_tower"],
                           params["fc_w"], params["fc_b"], F,
                           tile_rows=TB, num_tiles=num_tiles)
    return scores[:B]                            # .view(-1)


# ----------------------------------------------------------------------------
# Parameter init (deterministic, xavier_uniform like _init_weights)
# ----------------------------------------------------------------------------
def xavier_uniform(key, shape, dtype=jnp.float32):
    fan_in, fan_out = shape[0], shape[1]
    limit = jnp.sqrt(6.0 / (fan_in + fan_out))
    return jax.random.uniform(key, shape, dtype, minval=-limit, maxval=limit)


def init_neumf_params(key, num_factors, num_users, num_items, num_layers,
                      embed_dtype=jnp.bfloat16):
    F = num_factors
    D = F * (2 ** (num_layers - 1))              # MLP embedding dim
    keys = jax.random.split(key, 6 + 2 * num_layers)
    k = iter(keys)

    # GMF + MLP embeddings packed into one row per id; stored bf16.
    user_table = jnp.concatenate(
        [xavier_uniform(next(k), (num_users, F)),
         xavier_uniform(next(k), (num_users, D))], axis=1).astype(embed_dtype)
    item_table = jnp.concatenate(
        [xavier_uniform(next(k), (num_items, F)),
         xavier_uniform(next(k), (num_items, D))], axis=1).astype(embed_dtype)

    # MLP tower: 2D -> D -> ... -> F   (weights stored (in, out))
    tower = []
    in_dim = 2 * D
    for _ in range(num_layers):
        out_dim = in_dim // 2
        w = xavier_uniform(next(k), (in_dim, out_dim))
        b = 0.01 * jax.random.normal(next(k), (1, out_dim), jnp.float32)
        tower.append((w, b))
        in_dim = out_dim

    fc_w = xavier_uniform(next(k), (2 * F, 1))
    fc_b = 0.01 * jax.random.normal(next(k), (1, 1), jnp.float32)

    return {"num_factors": F, "user_table": user_table, "item_table": item_table,
            "mlp_tower": tower, "fc_w": fc_w, "fc_b": fc_b}


# ----------------------------------------------------------------------------
# Pure-JAX reference (for a quick sanity check)
# ----------------------------------------------------------------------------
def neumf_ref(params, user, item):
    F = params["num_factors"]
    f32 = jnp.float32
    u = params["user_table"][user].astype(f32)
    i = params["item_table"][item].astype(f32)
    gmf_vec = u[:, :F] * i[:, :F]
    h = jnp.concatenate([u[:, F:], i[:, F:]], axis=-1)
    for w, b in params["mlp_tower"]:
        h = jnp.maximum(h @ w + b, 0.0)
    embeds = jnp.concatenate([gmf_vec, h], axis=-1)
    return jax.nn.sigmoid(embeds @ params["fc_w"] + params["fc_b"]).reshape(-1)


if __name__ == "__main__":
    num_factors = 16
    num_users = 32
    num_items = 48
    num_layers = 3
    batch = 8

    key = jax.random.PRNGKey(0)
    kp, ku, ki = jax.random.split(key, 3)
    params = init_neumf_params(kp, num_factors, num_users, num_items, num_layers)

    user = jax.random.randint(ku, (batch,), 0, num_users)
    item = jax.random.randint(ki, (batch,), 0, num_items)

    out = jax.block_until_ready(neumf_apply(params, user, item))
    ref = neumf_ref(params, user, item)

    assert out.shape == (batch,)
    assert jnp.allclose(out, ref, atol=1e-4, rtol=1e-4), (out, ref)

    print("KERNEL_OK")
</pallas_src>

<mosaic_0001>
module attributes {stable_mosaic.version = 11 : i64} {
  func.func @kernel(%arg0: i32, %arg1: memref<8x80xbf16, #tpu.memory_space<vmem>>, %arg2: memref<8x80xbf16, #tpu.memory_space<vmem>>, %arg3: memref<64x80xf32, #tpu.memory_space<vmem>>, %arg4: memref<64x80xf32, #tpu.memory_space<vmem>>, %arg5: memref<64x1xf32, #tpu.memory_space<vmem>>, %arg6: memref<32x64xf32, #tpu.memory_space<vmem>>, %arg7: memref<32x1xf32, #tpu.memory_space<vmem>>, %arg8: memref<16x32xf32, #tpu.memory_space<vmem>>, %arg9: memref<16x1xf32, #tpu.memory_space<vmem>>, %arg10: memref<1x80xf32, #tpu.memory_space<vmem>>, %arg11: memref<1x16xf32, #tpu.memory_space<vmem>>, %arg12: memref<1x1xf32, #tpu.memory_space<vmem>>, %arg13: memref<1x1x8xf32, #tpu.memory_space<vmem>>) attributes {dimension_semantics = [#tpu.dimension_semantics<parallel>], iteration_bounds = array<i64: 1>, scalar_prefetch = 0 : i64, scratch_operands = 0 : i64, tpu.core_type = #tpu.core_type<tc>, window_params = [{transform_indices = @transform_0, window_bounds = array<i64: 8, 80>}, {transform_indices = @transform_1, window_bounds = array<i64: 8, 80>}, {pipeline_mode = #tpu.pipeline_mode<synchronous>, transform_indices = @transform_2, window_bounds = array<i64: 64, 80>}, {pipeline_mode = #tpu.pipeline_mode<synchronous>, transform_indices = @transform_3, window_bounds = array<i64: 64, 80>}, {pipeline_mode = #tpu.pipeline_mode<synchronous>, transform_indices = @transform_4, window_bounds = array<i64: 64, 1>}, {pipeline_mode = #tpu.pipeline_mode<synchronous>, transform_indices = @transform_5, window_bounds = array<i64: 32, 64>}, {pipeline_mode = #tpu.pipeline_mode<synchronous>, transform_indices = @transform_6, window_bounds = array<i64: 32, 1>}, {pipeline_mode = #tpu.pipeline_mode<synchronous>, transform_indices = @transform_7, window_bounds = array<i64: 16, 32>}, {pipeline_mode = #tpu.pipeline_mode<synchronous>, transform_indices = @transform_8, window_bounds = array<i64: 16, 1>}, {pipeline_mode = #tpu.pipeline_mode<synchronous>, transform_indices = @transform_9, window_bounds = array<i64: 1, 80>}, {pipeline_mode = #tpu.pipeline_mode<synchronous>, transform_indices = @transform_10, window_bounds = array<i64: 1, 16>}, {pipeline_mode = #tpu.pipeline_mode<synchronous>, transform_indices = @transform_11, window_bounds = array<i64: 1, 1>}, {transform_indices = @transform_12, window_bounds = array<i64: 1, 1, 8>}]} {
    %c0 = arith.constant 0 : index
    %c0_0 = arith.constant 0 : index
    %0 = vector.load %arg1[%c0, %c0_0] : memref<8x80xbf16, #tpu.memory_space<vmem>>, vector<8x80xbf16>
    %1 = arith.extf %0 : vector<8x80xbf16> to vector<8x80xf32>
    %c0_1 = arith.constant 0 : index
    %c0_2 = arith.constant 0 : index
    %2 = vector.load %arg2[%c0_1, %c0_2] : memref<8x80xbf16, #tpu.memory_space<vmem>>, vector<8x80xbf16>
    %3 = arith.extf %2 : vector<8x80xbf16> to vector<8x80xf32>
    %c0_3 = arith.constant 0 : index
    %c0_4 = arith.constant 0 : index
    %4 = vector.load %arg3[%c0_3, %c0_4] : memref<64x80xf32, #tpu.memory_space<vmem>>, vector<64x80xf32>
    %cst = arith.constant dense<0.000000e+00> : vector<64x8xf32>
    %5 = tpu.matmul %4, %1, %cst {dimension_numbers = #tpu.dot_dimension_numbers<[1], [1], [0], [0], [0, 0, 1, 0], [], []>} : vector<64x80xf32>, vector<8x80xf32>, vector<64x8xf32> -> vector<64x8xf32>
    %c0_5 = arith.constant 0 : index
    %c0_6 = arith.constant 0 : index
    %6 = vector.load %arg4[%c0_5, %c0_6] : memref<64x80xf32, #tpu.memory_space<vmem>>, vector<64x80xf32>
    %cst_7 = arith.constant dense<0.000000e+00> : vector<64x8xf32>
    %7 = tpu.matmul %6, %3, %cst_7 {dimension_numbers = #tpu.dot_dimension_numbers<[1], [1], [0], [0], [0, 0, 1, 0], [], []>} : vector<64x80xf32>, vector<8x80xf32>, vector<64x8xf32> -> vector<64x8xf32>
    %8 = arith.addf %5, %7 : vector<64x8xf32>
    %c0_8 = arith.constant 0 : index
    %c0_9 = arith.constant 0 : index
    %9 = vector.load %arg5[%c0_8, %c0_9] : memref<64x1xf32, #tpu.memory_space<vmem>>, vector<64x1xf32>
    %10 = vector.broadcast %9 : vector<64x1xf32> to vector<64x8xf32>
    %11 = arith.addf %8, %10 : vector<64x8xf32>
    %cst_10 = arith.constant 0.000000e+00 : f32
    %12 = vector.broadcast %cst_10 : f32 to vector<64x8xf32>
    %13 = arith.maximumf %11, %12 : vector<64x8xf32>
    %c0_11 = arith.constant 0 : index
    %c0_12 = arith.constant 0 : index
    %14 = vector.load %arg6[%c0_11, %c0_12] : memref<32x64xf32, #tpu.memory_space<vmem>>, vector<32x64xf32>
    %cst_13 = arith.constant dense<0.000000e+00> : vector<32x8xf32>
    %15 = tpu.matmul %14, %13, %cst_13 {dimension_numbers = #tpu.dot_dimension_numbers<[1], [0], [0], [1], [0, 0, 1, 1], [], []>} : vector<32x64xf32>, vector<64x8xf32>, vector<32x8xf32> -> vector<32x8xf32>
    %c0_14 = arith.constant 0 : index
    %c0_15 = arith.constant 0 : index
    %16 = vector.load %arg7[%c0_14, %c0_15] : memref<32x1xf32, #tpu.memory_space<vmem>>, vector<32x1xf32>
    %17 = vector.broadcast %16 : vector<32x1xf32> to vector<32x8xf32>
    %18 = arith.addf %15, %17 : vector<32x8xf32>
    %cst_16 = arith.constant 0.000000e+00 : f32
    %19 = vector.broadcast %cst_16 : f32 to vector<32x8xf32>
    %20 = arith.maximumf %18, %19 : vector<32x8xf32>
    %c0_17 = arith.constant 0 : index
    %c0_18 = arith.constant 0 : index
    %21 = vector.load %arg8[%c0_17, %c0_18] : memref<16x32xf32, #tpu.memory_space<vmem>>, vector<16x32xf32>
    %cst_19 = arith.constant dense<0.000000e+00> : vector<16x8xf32>
    %22 = tpu.matmul %21, %20, %cst_19 {dimension_numbers = #tpu.dot_dimension_numbers<[1], [0], [0], [1], [0, 0, 1, 1], [], []>} : vector<16x32xf32>, vector<32x8xf32>, vector<16x8xf32> -> vector<16x8xf32>
    %c0_20 = arith.constant 0 : index
    %c0_21 = arith.constant 0 : index
    %23 = vector.load %arg9[%c0_20, %c0_21] : memref<16x1xf32, #tpu.memory_space<vmem>>, vector<16x1xf32>
    %24 = vector.broadcast %23 : vector<16x1xf32> to vector<16x8xf32>
    %25 = arith.addf %22, %24 : vector<16x8xf32>
    %cst_22 = arith.constant 0.000000e+00 : f32
    %26 = vector.broadcast %cst_22 : f32 to vector<16x8xf32>
    %27 = arith.maximumf %25, %26 : vector<16x8xf32>
    %28 = arith.mulf %1, %3 : vector<8x80xf32>
    %c0_23 = arith.constant 0 : index
    %c0_24 = arith.constant 0 : index
    %29 = vector.load %arg10[%c0_23, %c0_24] : memref<1x80xf32, #tpu.memory_space<vmem>>, vector<1x80xf32>
    %cst_25 = arith.constant dense<0.000000e+00> : vector<1x8xf32>
    %30 = tpu.matmul %29, %28, %cst_25 {dimension_numbers = #tpu.dot_dimension_numbers<[1], [1], [0], [0], [0, 0, 1, 0], [], []>} : vector<1x80xf32>, vector<8x80xf32>, vector<1x8xf32> -> vector<1x8xf32>
    %c0_26 = arith.constant 0 : index
    %c0_27 = arith.constant 0 : index
    %31 = vector.load %arg11[%c0_26, %c0_27] : memref<1x16xf32, #tpu.memory_space<vmem>>, vector<1x16xf32>
    %cst_28 = arith.constant dense<0.000000e+00> : vector<1x8xf32>
    %32 = tpu.matmul %31, %27, %cst_28 {dimension_numbers = #tpu.dot_dimension_numbers<[1], [0], [0], [1], [0, 0, 1, 1], [], []>} : vector<1x16xf32>, vector<16x8xf32>, vector<1x8xf32> -> vector<1x8xf32>
    %33 = arith.addf %30, %32 : vector<1x8xf32>
    %c0_29 = arith.constant 0 : index
    %c0_30 = arith.constant 0 : index
    %34 = vector.load %arg12[%c0_29, %c0_30] : memref<1x1xf32, #tpu.memory_space<vmem>>, vector<1x1xf32>
    %35 = vector.broadcast %34 : vector<1x1xf32> to vector<1x8xf32>
    %36 = arith.addf %33, %35 : vector<1x8xf32>
    %37 = arith.negf %36 : vector<1x8xf32>
    %38 = math.exp %37 : vector<1x8xf32>
    %cst_31 = arith.constant 1.000000e+00 : f32
    %39 = vector.broadcast %cst_31 : f32 to vector<1x8xf32>
    %40 = arith.addf %39, %38 : vector<1x8xf32>
    %41 = arith.divf %39, %40 : vector<1x8xf32>
    %42 = vector.shape_cast %41 : vector<1x8xf32> to vector<1x1x8xf32>
    %c0_32 = arith.constant 0 : index
    %c0_33 = arith.constant 0 : index
    %c0_34 = arith.constant 0 : index
    %43 = vector.load %arg13[%c0_32, %c0_33, %c0_34] : memref<1x1x8xf32, #tpu.memory_space<vmem>>, vector<1x1x8xf32>
    tpu.vector_store %arg13[%c0_32, %c0_33, %c0_34], %42 {strides = array<i32>} : memref<1x1x8xf32, #tpu.memory_space<vmem>>, vector<1x1x8xf32>,
    return
  }
  func.func @transform_0(%arg0: i32) -> (i32, i32) {
    %c0_i32 = arith.constant 0 : i32
    %c0_i32_0 = arith.constant 0 : i32
    return %arg0, %c0_i32 : i32, i32
  }
  func.func @transform_1(%arg0: i32) -> (i32, i32) {
    %c0_i32 = arith.constant 0 : i32
    %c0_i32_0 = arith.constant 0 : i32
    return %arg0, %c0_i32 : i32, i32
  }
  func.func @transform_2(%arg0: i32) -> (i32, i32) {
    %c0_i32 = arith.constant 0 : i32
    %c0_i32_0 = arith.constant 0 : i32
    %c0_i32_1 = arith.constant 0 : i32
    return %c0_i32, %c0_i32_0 : i32, i32
  }
  func.func @transform_3(%arg0: i32) -> (i32, i32) {
    %c0_i32 = arith.constant 0 : i32
    %c0_i32_0 = arith.constant 0 : i32
    %c0_i32_1 = arith.constant 0 : i32
    return %c0_i32, %c0_i32_0 : i32, i32
  }
  func.func @transform_4(%arg0: i32) -> (i32, i32) {
    %c0_i32 = arith.constant 0 : i32
    %c0_i32_0 = arith.constant 0 : i32
    %c0_i32_1 = arith.constant 0 : i32
    return %c0_i32, %c0_i32_0 : i32, i32
  }
  func.func @transform_5(%arg0: i32) -> (i32, i32) {
    %c0_i32 = arith.constant 0 : i32
    %c0_i32_0 = arith.constant 0 : i32
    %c0_i32_1 = arith.constant 0 : i32
    return %c0_i32, %c0_i32_0 : i32, i32
  }
  func.func @transform_6(%arg0: i32) -> (i32, i32) {
    %c0_i32 = arith.constant 0 : i32
    %c0_i32_0 = arith.constant 0 : i32
    %c0_i32_1 = arith.constant 0 : i32
    return %c0_i32, %c0_i32_0 : i32, i32
  }
  func.func @transform_7(%arg0: i32) -> (i32, i32) {
    %c0_i32 = arith.constant 0 : i32
    %c0_i32_0 = arith.constant 0 : i32
    %c0_i32_1 = arith.constant 0 : i32
    return %c0_i32, %c0_i32_0 : i32, i32
  }
  func.func @transform_8(%arg0: i32) -> (i32, i32) {
    %c0_i32 = arith.constant 0 : i32
    %c0_i32_0 = arith.constant 0 : i32
    %c0_i32_1 = arith.constant 0 : i32
    return %c0_i32, %c0_i32_0 : i32, i32
  }
  func.func @transform_9(%arg0: i32) -> (i32, i32) {
    %c0_i32 = arith.constant 0 : i32
    %c0_i32_0 = arith.constant 0 : i32
    %c0_i32_1 = arith.constant 0 : i32
    return %c0_i32, %c0_i32_0 : i32, i32
  }
  func.func @transform_10(%arg0: i32) -> (i32, i32) {
    %c0_i32 = arith.constant 0 : i32
    %c0_i32_0 = arith.constant 0 : i32
    %c0_i32_1 = arith.constant 0 : i32
    return %c0_i32, %c0_i32_0 : i32, i32
  }
  func.func @transform_11(%arg0: i32) -> (i32, i32) {
    %c0_i32 = arith.constant 0 : i32
    %c0_i32_0 = arith.constant 0 : i32
    %c0_i32_1 = arith.constant 0 : i32
    return %c0_i32, %c0_i32_0 : i32, i32
  }
  func.func @transform_12(%arg0: i32) -> (i32, i32, i32) {
    %c0_i32 = arith.constant 0 : i32
    %c0_i32_0 = arith.constant 0 : i32
    %c0_i32_1 = arith.constant 0 : i32
    return %arg0, %c0_i32, %c0_i32_0 : i32, i32, i32
  }
}

</mosaic_0001>

<llo_original>
// kernel: tpu_custom_call.1
$region0: #{tpu_custom_call.1}
  #allocation0 [shape = 'u32[]', space=smem, size = 0x4, offset = 0x4, fixed_abs, tag = 'smem constant byte address 0x4 - core index']
  #allocation1 [shape = 'u32[72,128]{1,0:T(1,128)}', space=vmem, size = 0x9000, scoped, tag = 'internal scratch']
  #allocation2 [shape = 'f32[1,1]{1,0:T(1,128)S(1)}', space=vmem, size = 0x200, scoped, tag = 'scoped memory for tpu_custom_call.1']
  %s0 = inlined_call_operand.hbm [shape: bf16[8,80], index: 0, kind: input, shape index: {}]
  %s1 = inlined_call_operand.hbm [shape: bf16[8,80], index: 1, kind: input, shape index: {}]
  %s2 = inlined_call_operand.vmem [shape: f32[64,80], index: 2, kind: input, shape index: {}]
  %s3 = inlined_call_operand.hbm [shape: f32[64,80], index: 3, kind: input, shape index: {}]
  %s4 = inlined_call_operand.vmem [shape: f32[64,1], index: 4, kind: input, shape index: {}]
  %s5 = inlined_call_operand.vmem [shape: f32[32,64], index: 5, kind: input, shape index: {}]
  %s6 = inlined_call_operand.vmem [shape: f32[32,1], index: 6, kind: input, shape index: {}]
  %s7 = inlined_call_operand.vmem [shape: f32[16,32], index: 7, kind: input, shape index: {}]
  %s8 = inlined_call_operand.vmem [shape: f32[16,1], index: 8, kind: input, shape index: {}]
  %s9 = inlined_call_operand.vmem [shape: f32[1,80], index: 9, kind: input, shape index: {}]
  %s10 = inlined_call_operand.vmem [shape: f32[1,16], index: 10, kind: input, shape index: {}]
  %s11 = inlined_call_operand.<no memory space> [shape: f32[1,1], index: 11, kind: input, shape index: {}]
  %s12 = inlined_call_operand.hbm [shape: f32[1,1,8], index: 12, kind: output, shape index: {}]
  %s13 = sld [smem:[#allocation0]]
  $region70: #{tpu_custom_call.1} parent=0
    _
  %s15 = ssub.s32 1, %s13
  %s16 = scalar_select 0, %s15, %s13
  %v17 = vstv %s11
  %18 = vst [vmem:[#allocation2] sm:$0x1] %v17
  $region1: #{tpu_custom_call.1} parent=0
    #allocation3 [shape = 'u8[2048]{0}', space=vmem, size = 0x800, scoped, tag = 'input window, operand 0, single buffered']
    #allocation4 [shape = 's32[1]{0}', space=sflag, size = 0x4, scoped, tag = 'scoped memory for tpu_custom_call.1']
    #allocation5 [shape = 's32[1]{0}', space=sflag, size = 0x4, scoped, tag = 'scoped memory for tpu_custom_call.1']
    #allocation6 [shape = 'u8[2048]{0}', space=vmem, size = 0x800, scoped, tag = 'input window, operand 1, single buffered']
    #allocation7 [shape = 's32[1]{0}', space=sflag, size = 0x4, scoped, tag = 'scoped memory for tpu_custom_call.1']
    #allocation8 [shape = 'u8[32768]{0}', space=vmem, size = 0x8000, scoped, tag = 'input window, operand 3, single buffered']
    #allocation9 [shape = 'u8[512]{0}', space=vmem, size = 0x400, scoped, tag = 'output window, operand 0, single buffered']
    %19 = vsyncpa [#allocation4], 0
    %20 = vsyncpa [#allocation7], 0
    %21 = vsyncpa [#allocation5], 0
    // Predicated region
    $region2: #{tpu_custom_call.1} parent=1 // pred_check
      _
    $region3: #{tpu_custom_call.1} parent=1 // pred_check_branch
      %23 = sbr.rel (0) target = $region5
    $region4: #{tpu_custom_call.1} parent=1 // pred_region
      %25 = vsyncadd [#allocation4], 0
      %s27 = sshll.u32 %s0, 4
      %s28 = int_to_ptr.hbm [resolvable:$true] %s27
      %s29 = sshll.u32 [#allocation3], 4
      %s30 = int_to_ptr.vmem [resolvable:$true] %s29
      %32 = dma.hbm_to_vmem [thread:$0]  %s28, 64, %s30, [#allocation4]
    $region5: #{tpu_custom_call.1} parent=1 // pred_fallthru
      _
    // Predicated region
    $region6: #{tpu_custom_call.1} parent=1 // pred_check
      _
    $region7: #{tpu_custom_call.1} parent=1 // pred_check_branch
      %34 = sbr.rel (0) target = $region9
    $region8: #{tpu_custom_call.1} parent=1 // pred_region
      %36 = vsyncadd [#allocation7], 0
      %s38 = sshll.u32 %s1, 4
      %s39 = int_to_ptr.hbm [resolvable:$true] %s38
      %s40 = sshll.u32 [#allocation6], 4
      %s41 = int_to_ptr.vmem [resolvable:$true] %s40
      %43 = dma.hbm_to_vmem [thread:$0]  %s39, 64, %s41, [#allocation7]
    $region9: #{tpu_custom_call.1} parent=1 // pred_fallthru
      _
    // Predicated region
    $region10: #{tpu_custom_call.1} parent=1 // pred_check
      _
    $region11: #{tpu_custom_call.1} parent=1 // pred_check_branch
      %45 = sbr.rel (0) target = $region13
    $region12: #{tpu_custom_call.1} parent=1 // pred_region
      _
    $region13: #{tpu_custom_call.1} parent=1 // pred_fallthru
      _
    // Predicated region
    $region14: #{tpu_custom_call.1} parent=1 // pred_check
      _
    $region15: #{tpu_custom_call.1} parent=1 // pred_check_branch
      %47 = sbr.rel (0) target = $region17
    $region16: #{tpu_custom_call.1} parent=1 // pred_region
      %49 = vsyncadd [#allocation7], 0
      %s50 = sshll.u32 %s3, 4
      %s51 = int_to_ptr.hbm [resolvable:$true] %s50
      %s52 = sshll.u32 [#allocation8], 4
      %s53 = int_to_ptr.vmem [resolvable:$true] %s52
      %58 = dma.hbm_to_vmem [thread:$0]  %s51, 1024, %s53, [#allocation7], 128, 128, 8
    $region17: #{tpu_custom_call.1} parent=1 // pred_fallthru
      _
    // Predicated region
    $region18: #{tpu_custom_call.1} parent=1 // pred_check
      _
    $region19: #{tpu_custom_call.1} parent=1 // pred_check_branch
      %60 = sbr.rel (0) target = $region21
    $region20: #{tpu_custom_call.1} parent=1 // pred_region
      _
    $region21: #{tpu_custom_call.1} parent=1 // pred_fallthru
      _
    // Predicated region
    $region22: #{tpu_custom_call.1} parent=1 // pred_check
      _
    $region23: #{tpu_custom_call.1} parent=1 // pred_check_branch
      %62 = sbr.rel (0) target = $region25
    $region24: #{tpu_custom_call.1} parent=1 // pred_region
      _
    $region25: #{tpu_custom_call.1} parent=1 // pred_fallthru
      _
    // Predicated region
    $region26: #{tpu_custom_call.1} parent=1 // pred_check
      _
    $region27: #{tpu_custom_call.1} parent=1 // pred_check_branch
      %64 = sbr.rel (0) target = $region29
    $region28: #{tpu_custom_call.1} parent=1 // pred_region
      _
    $region29: #{tpu_custom_call.1} parent=1 // pred_fallthru
      _
    // Predicated region
    $region30: #{tpu_custom_call.1} parent=1 // pred_check
      _
    $region31: #{tpu_custom_call.1} parent=1 // pred_check_branch
      %66 = sbr.rel (0) target = $region33
    $region32: #{tpu_custom_call.1} parent=1 // pred_region
      _
    $region33: #{tpu_custom_call.1} parent=1 // pred_fallthru
      _
    // Predicated region
    $region34: #{tpu_custom_call.1} parent=1 // pred_check
      _
    $region35: #{tpu_custom_call.1} parent=1 // pred_check_branch
      %68 = sbr.rel (0) target = $region37
    $region36: #{tpu_custom_call.1} parent=1 // pred_region
      _
    $region37: #{tpu_custom_call.1} parent=1 // pred_fallthru
      _
    // Predicated region
    $region38: #{tpu_custom_call.1} parent=1 // pred_check
      _
    $region39: #{tpu_custom_call.1} parent=1 // pred_check_branch
      %70 = sbr.rel (0) target = $region41
    $region40: #{tpu_custom_call.1} parent=1 // pred_region
      _
    $region41: #{tpu_custom_call.1} parent=1 // pred_fallthru
      _
    // Predicated region
    $region42: #{tpu_custom_call.1} parent=1 // pred_check
      _
    $region43: #{tpu_custom_call.1} parent=1 // pred_check_branch
      %72 = sbr.rel (0) target = $region45
    $region44: #{tpu_custom_call.1} parent=1 // pred_region
      _
    $region45: #{tpu_custom_call.1} parent=1 // pred_fallthru
      _
    // Predicated region
    $region46: #{tpu_custom_call.1} parent=1 // pred_check
      _
    $region47: #{tpu_custom_call.1} parent=1 // pred_check_branch
      %74 = sbr.rel (0) target = $region49
    $region48: #{tpu_custom_call.1} parent=1 // pred_region
      _
    $region49: #{tpu_custom_call.1} parent=1 // pred_fallthru
      _
    // Predicated region
    $region50: #{tpu_custom_call.1} parent=1 // pred_check
      _
    $region51: #{tpu_custom_call.1} parent=1 // pred_check_branch
      %76 = sbr.rel (0) target = $region53
    $region52: #{tpu_custom_call.1} parent=1 // pred_region
      %78 = dma.done [#allocation4], 64
    $region53: #{tpu_custom_call.1} parent=1 // pred_fallthru
      _
    // Predicated region
    $region54: #{tpu_custom_call.1} parent=1 // pred_check
      _
    $region55: #{tpu_custom_call.1} parent=1 // pred_check_branch
      %80 = sbr.rel (0) target = $region57
    $region56: #{tpu_custom_call.1} parent=1 // pred_region
      %82 = dma.done [#allocation7], 64
    $region57: #{tpu_custom_call.1} parent=1 // pred_fallthru
      _
    // Predicated region
    $region58: #{tpu_custom_call.1} parent=1 // pred_check
      _
    $region59: #{tpu_custom_call.1} parent=1 // pred_check_branch
      %84 = sbr.rel (0) target = $region61
    $region60: #{tpu_custom_call.1} parent=1 // pred_region
      %86 = dma.done [#allocation7], 1024
    $region61: #{tpu_custom_call.1} parent=1 // pred_fallthru
      _
    %v87 = vld [vmem:[#allocation3] sm:$0xf]
    %v88 = vunpack.c.l.bf16 %v87
    %v89 = vld [vmem:[#allocation6] sm:$0xf]
    %v90 = vunpack.c.l.bf16 %v89
    %v91 = vld [vmem:[%s2] sm:$0xff]
    %v92 = vld [vmem:[%s2 + $0x8] sm:$0xff]
    %v93 = vld [vmem:[%s2 + $0x10] sm:$0xff]
    %v94 = vld [vmem:[%s2 + $0x18] sm:$0xff]
    %v95 = vld [vmem:[%s2 + $0x20] sm:$0xff]
    %v96 = vld [vmem:[%s2 + $0x28] sm:$0xff]
    %v97 = vld [vmem:[%s2 + $0x30] sm:$0xff]
    %v98 = vld [vmem:[%s2 + $0x38] sm:$0xff]
    %v99 = vld [vmem:[#allocation8] sm:$0xff]
    %v100 = vld [vmem:[#allocation8 + $0x8] sm:$0xff]
    %v101 = vld [vmem:[#allocation8 + $0x10] sm:$0xff]
    %v102 = vld [vmem:[#allocation8 + $0x18] sm:$0xff]
    %v103 = vld [vmem:[#allocation8 + $0x20] sm:$0xff]
    %v104 = vld [vmem:[#allocation8 + $0x28] sm:$0xff]
    %v105 = vld [vmem:[#allocation8 + $0x30] sm:$0xff]
    %v106 = vld [vmem:[#allocation8 + $0x38] sm:$0xff]
    %vm107 = vcmask 654336
    %v109 = vsel %vm107, %v99, 0
    %v112 = vsel %vm107, %v100, 0
    %v115 = vsel %vm107, %v101, 0
    %v118 = vsel %vm107, %v102, 0
    %v121 = vsel %vm107, %v103, 0
    %v124 = vsel %vm107, %v104, 0
    %v127 = vsel %vm107, %v105, 0
    %v130 = vsel %vm107, %v106, 0
    %v133 = vsel %vm107, %v90, 0
    %135 = vmatpush.xpose.msra.mxu0 0.0
    %136 = vmatpush.xpose.msra.mxu0 0.0
    %137 = vmatpush.xpose.msra.mxu0 0.0
    %138 = vmatpush.xpose.msra.mxu0 0.0
    %139 = vmatpush.xpose.msra.mxu0 0.0
    %140 = vmatpush.xpose.msra.mxu0 0.0
    %141 = vmatpush.xpose.msra.mxu0 0.0
    %142 = vmatpush.xpose.msra.mxu0 0.0
    %143 = vmatpush.xpose.msra.mxu0 0.0
    %144 = vmatpush.xpose.msra.mxu0 0.0
    %145 = vmatpush.xpose.msra.mxu0 0.0
    %146 = vmatpush.xpose.msra.mxu0 0.0
    %147 = vmatpush.xpose.msra.mxu0 0.0
    %148 = vmatpush.xpose.msra.mxu0 0.0
    %149 = vmatpush.xpose.msra.mxu0 0.0
    %150 = vmatpush.xpose.msra.mxu0 %v133
    %151 = vmatmul.f32.gmra.mxu0 %v109
    %v152 = vpop.f32.mrf.mxu0
    %v153 = vadd.f32 0.0, %v152
    %154 = vmatmul.f32.gmra.mxu0 %v112
    %v155 = vpop.f32.mrf.mxu0
    %v156 = vadd.f32 0.0, %v155
    %157 = vmatmul.f32.gmra.mxu0 %v115
    %v158 = vpop.f32.mrf.mxu0
    %v159 = vadd.f32 0.0, %v158
    %160 = vmatmul.f32.gmra.mxu0 %v118
    %v161 = vpop.f32.mrf.mxu0
    %v162 = vadd.f32 0.0, %v161
    %163 = vmatmul.f32.gmra.mxu0 %v121
    %v164 = vpop.f32.mrf.mxu0
    %v165 = vadd.f32 0.0, %v164
    %166 = vmatmul.f32.gmra.mxu0 %v124
    %v167 = vpop.f32.mrf.mxu0
    %v168 = vadd.f32 0.0, %v167
    %169 = vmatmul.f32.gmra.mxu0 %v127
    %v170 = vpop.f32.mrf.mxu0
    %v171 = vadd.f32 0.0, %v170
    %172 = vmatmul.f32.gmra.mxu0 %v130
    %v173 = vpop.f32.mrf.mxu0
    %v174 = vadd.f32 0.0, %v173
    %175 = vdwg.mxu0
    %v177 = vsel %vm107, %v91, 0
    %v180 = vsel %vm107, %v92, 0
    %v183 = vsel %vm107, %v93, 0
    %v186 = vsel %vm107, %v94, 0
    %v189 = vsel %vm107, %v95, 0
    %v192 = vsel %vm107, %v96, 0
    %v195 = vsel %vm107, %v97, 0
    %v198 = vsel %vm107, %v98, 0
    %v201 = vsel %vm107, %v88, 0
    %203 = vmatpush.xpose.msra.mxu0 0.0
    %204 = vmatpush.xpose.msra.mxu0 0.0
    %205 = vmatpush.xpose.msra.mxu0 0.0
    %206 = vmatpush.xpose.msra.mxu0 0.0
    %207 = vmatpush.xpose.msra.mxu0 0.0
    %208 = vmatpush.xpose.msra.mxu0 0.0
    %209 = vmatpush.xpose.msra.mxu0 0.0
    %210 = vmatpush.xpose.msra.mxu0 0.0
    %211 = vmatpush.xpose.msra.mxu0 0.0
    %212 = vmatpush.xpose.msra.mxu0 0.0
    %213 = vmatpush.xpose.msra.mxu0 0.0
    %214 = vmatpush.xpose.msra.mxu0 0.0
    %215 = vmatpush.xpose.msra.mxu0 0.0
    %216 = vmatpush.xpose.msra.mxu0 0.0
    %217 = vmatpush.xpose.msra.mxu0 0.0
    %218 = vmatpush.xpose.msra.mxu0 %v201
    %219 = vmatmul.f32.gmra.mxu0 %v177
    %v220 = vpop.f32.mrf.mxu0
    %v221 = vadd.f32 %v153, %v220
    %222 = vmatmul.f32.gmra.mxu0 %v180
    %v223 = vpop.f32.mrf.mxu0
    %v224 = vadd.f32 %v156, %v223
    %225 = vmatmul.f32.gmra.mxu0 %v183
    %v226 = vpop.f32.mrf.mxu0
    %v227 = vadd.f32 %v159, %v226
    %228 = vmatmul.f32.gmra.mxu0 %v186
    %v229 = vpop.f32.mrf.mxu0
    %v230 = vadd.f32 %v162, %v229
    %231 = vmatmul.f32.gmra.mxu0 %v189
    %v232 = vpop.f32.mrf.mxu0
    %v233 = vadd.f32 %v165, %v232
    %234 = vmatmul.f32.gmra.mxu0 %v192
    %v235 = vpop.f32.mrf.mxu0
    %v236 = vadd.f32 %v168, %v235
    %237 = vmatmul.f32.gmra.mxu0 %v195
    %v238 = vpop.f32.mrf.mxu0
    %v239 = vadd.f32 %v171, %v238
    %240 = vmatmul.f32.gmra.mxu0 %v198
    %v241 = vpop.f32.mrf.mxu0
    %v242 = vadd.f32 %v174, %v241
    %243 = vdwg.mxu0
    %v244 = vld [vmem:[%s4] sm:$0xff]
    %v245 = vld [vmem:[%s4 + $0x8] sm:$0xff]
    %v246 = vld [vmem:[%s4 + $0x10] sm:$0xff]
    %v247 = vld [vmem:[%s4 + $0x18] sm:$0xff]
    %v248 = vld [vmem:[%s4 + $0x20] sm:$0xff]
    %v249 = vld [vmem:[%s4 + $0x28] sm:$0xff]
    %v250 = vld [vmem:[%s4 + $0x30] sm:$0xff]
    %v251 = vld [vmem:[%s4 + $0x38] sm:$0xff]
    %253 = vset.pattern.permute.xlu0 0
    %254 = vperm.xlu0 %253, %v244
    %v255 = vpop.permute.xlu0 %254
    %258 = vset.pattern.permute.xlu0 0
    %259 = vperm.xlu0 %258, %v245
    %v260 = vpop.permute.xlu0 %259
    %263 = vset.pattern.permute.xlu0 0
    %264 = vperm.xlu0 %263, %v246
    %v265 = vpop.permute.xlu0 %264
    %268 = vset.pattern.permute.xlu0 0
    %269 = vperm.xlu0 %268, %v247
    %v270 = vpop.permute.xlu0 %269
    %273 = vset.pattern.permute.xlu0 0
    %274 = vperm.xlu0 %273, %v248
    %v275 = vpop.permute.xlu0 %274
    %278 = vset.pattern.permute.xlu0 0
    %279 = vperm.xlu0 %278, %v249
    %v280 = vpop.permute.xlu0 %279
    %283 = vset.pattern.permute.xlu0 0
    %284 = vperm.xlu0 %283, %v250
    %v285 = vpop.permute.xlu0 %284
    %288 = vset.pattern.permute.xlu0 0
    %289 = vperm.xlu0 %288, %v251
    %v290 = vpop.permute.xlu0 %289
    %v292 = vadd.f32 %v221, %v255
    %v293 = vadd.f32 %v224, %v260
    %v294 = vadd.f32 %v227, %v265
    %v295 = vadd.f32 %v230, %v270
    %v296 = vadd.f32 %v233, %v275
    %v297 = vadd.f32 %v236, %v280
    %v298 = vadd.f32 %v239, %v285
    %v299 = vadd.f32 %v242, %v290
    %v300 = vmax.f32 %v292, 0.0
    %v301 = vmax.f32 %v293, 0.0
    %v302 = vmax.f32 %v294, 0.0
    %v303 = vmax.f32 %v295, 0.0
    %v304 = vmax.f32 %v296, 0.0
    %v305 = vmax.f32 %v297, 0.0
    %v306 = vmax.f32 %v298, 0.0
    %v307 = vmax.f32 %v299, 0.0
    %v308 = vld [vmem:[%s5] sm:$0xff]
    %v309 = vld [vmem:[%s5 + $0x8] sm:$0xff]
    %v310 = vld [vmem:[%s5 + $0x10] sm:$0xff]
    %v311 = vld [vmem:[%s5 + $0x18] sm:$0xff]
    %v312 = vld [vmem:[%s6] sm:$0xff]
    %v313 = vld [vmem:[%s6 + $0x8] sm:$0xff]
    %v314 = vld [vmem:[%s6 + $0x10] sm:$0xff]
    %v315 = vld [vmem:[%s6 + $0x18] sm:$0xff]
    %317 = vset.pattern.permute.xlu0 0
    %318 = vperm.xlu0 %317, %v312
    %v319 = vpop.permute.xlu0 %318
    %322 = vset.pattern.permute.xlu0 0
    %323 = vperm.xlu0 %322, %v313
    %v324 = vpop.permute.xlu0 %323
    %327 = vset.pattern.permute.xlu0 0
    %328 = vperm.xlu0 %327, %v314
    %v329 = vpop.permute.xlu0 %328
    %332 = vset.pattern.permute.xlu0 0
    %333 = vperm.xlu0 %332, %v315
    %v334 = vpop.permute.xlu0 %333
    %vm336 = vcmask 523264
    %v338 = vsel %vm336, %v308, 0
    %v341 = vsel %vm336, %v309, 0
    %v344 = vsel %vm336, %v310, 0
    %v347 = vsel %vm336, %v311, 0
    %349 = vmatpush.msra.mxu0 0.0
    %350 = vmatpush.msra.mxu0 0.0
    %351 = vmatpush.msra.mxu0 0.0
    %352 = vmatpush.msra.mxu0 0.0
    %353 = vmatpush.msra.mxu0 0.0
    %354 = vmatpush.msra.mxu0 0.0
    %355 = vmatpush.msra.mxu0 0.0
    %356 = vmatpush.msra.mxu0 0.0
    %357 = vmatpush.msra.mxu0 %v307
    %358 = vmatpush.msra.mxu0 %v306
    %359 = vmatpush.msra.mxu0 %v305
    %360 = vmatpush.msra.mxu0 %v304
    %361 = vmatpush.msra.mxu0 %v303
    %362 = vmatpush.msra.mxu0 %v302
    %363 = vmatpush.msra.mxu0 %v301
    %364 = vmatpush.msra.mxu0 %v300
    %365 = vmatmul.f32.gmra.mxu0 %v338
    %v366 = vpop.f32.mrf.mxu0
    %v367 = vadd.f32 %v319, %v366
    %368 = vmatmul.f32.gmra.mxu0 %v341
    %v369 = vpop.f32.mrf.mxu0
    %v370 = vadd.f32 %v324, %v369
    %371 = vmatmul.f32.gmra.mxu0 %v344
    %v372 = vpop.f32.mrf.mxu0
    %v373 = vadd.f32 %v329, %v372
    %374 = vmatmul.f32.gmra.mxu0 %v347
    %v375 = vpop.f32.mrf.mxu0
    %v376 = vadd.f32 %v334, %v375
    %377 = vdwg.mxu0
    %v378 = vmax.f32 %v367, 0.0
    %v379 = vmax.f32 %v370, 0.0
    %v380 = vmax.f32 %v373, 0.0
    %v381 = vmax.f32 %v376, 0.0
    %v382 = vld [vmem:[%s7] sm:$0xff]
    %v383 = vld [vmem:[%s7 + $0x8] sm:$0xff]
    %v384 = vld [vmem:[%s8] sm:$0xff]
    %v385 = vld [vmem:[%s8 + $0x8] sm:$0xff]
    %387 = vset.pattern.permute.xlu0 0
    %388 = vperm.xlu0 %387, %v384
    %v389 = vpop.permute.xlu0 %388
    %392 = vset.pattern.permute.xlu0 0
    %393 = vperm.xlu0 %392, %v385
    %v394 = vpop.permute.xlu0 %393
    %vm396 = vcmask 261120
    %v398 = vsel %vm396, %v382, 0
    %v401 = vsel %vm396, %v383, 0
    %403 = vmatpush.msra.mxu0 0.0
    %404 = vmatpush.msra.mxu0 0.0
    %405 = vmatpush.msra.mxu0 0.0
    %406 = vmatpush.msra.mxu0 0.0
    %407 = vmatpush.msra.mxu0 0.0
    %408 = vmatpush.msra.mxu0 0.0
    %409 = vmatpush.msra.mxu0 0.0
    %410 = vmatpush.msra.mxu0 0.0
    %411 = vmatpush.msra.mxu0 0.0
    %412 = vmatpush.msra.mxu0 0.0
    %413 = vmatpush.msra.mxu0 0.0
    %414 = vmatpush.msra.mxu0 0.0
    %415 = vmatpush.msra.mxu0 %v381
    %416 = vmatpush.msra.mxu0 %v380
    %417 = vmatpush.msra.mxu0 %v379
    %418 = vmatpush.msra.mxu0 %v378
    %419 = vmatmul.f32.gmra.mxu0 %v398
    %v420 = vpop.f32.mrf.mxu0
    %v421 = vadd.f32 %v389, %v420
    %422 = vmatmul.f32.gmra.mxu0 %v401
    %v423 = vpop.f32.mrf.mxu0
    %v424 = vadd.f32 %v394, %v423
    %425 = vdwg.mxu0
    %v426 = vmax.f32 %v421, 0.0
    %v427 = vmax.f32 %v424, 0.0
    %v428 = vmul.f32 %v88, %v90
    %v429 = vld [vmem:[%s9] sm:$0x1]
    %v430 = vld [vmem:[%s10] sm:$0x1]
    %vm431 = vcmask 130048
    %v433 = vsel %vm431, %v430, 0
    %435 = vmatpush.msra.mxu0 0.0
    %436 = vmatpush.msra.mxu0 0.0
    %437 = vmatpush.msra.mxu0 0.0
    %438 = vmatpush.msra.mxu0 0.0
    %439 = vmatpush.msra.mxu0 0.0
    %440 = vmatpush.msra.mxu0 0.0
    %441 = vmatpush.msra.mxu0 0.0
    %442 = vmatpush.msra.mxu0 0.0
    %443 = vmatpush.msra.mxu0 0.0
    %444 = vmatpush.msra.mxu0 0.0
    %445 = vmatpush.msra.mxu0 0.0
    %446 = vmatpush.msra.mxu0 0.0
    %447 = vmatpush.msra.mxu0 0.0
    %448 = vmatpush.msra.mxu0 0.0
    %449 = vmatpush.msra.mxu0 %v427
    %450 = vmatpush.msra.mxu0 %v426
    %451 = vmatmul.f32.gmra.mxu0 %v433
    %v452 = vpop.f32.mrf.mxu0
    %v453 = vadd.f32 0.0, %v452
    %454 = vdwg.mxu0
    %v456 = vsel %vm107, %v429, 0
    %v459 = vsel %vm107, %v428, 0
    %461 = vmatpush.xpose.msra.mxu0 0.0
    %462 = vmatpush.xpose.msra.mxu0 0.0
    %463 = vmatpush.xpose.msra.mxu0 0.0
    %464 = vmatpush.xpose.msra.mxu0 0.0
    %465 = vmatpush.xpose.msra.mxu0 0.0
    %466 = vmatpush.xpose.msra.mxu0 0.0
    %467 = vmatpush.xpose.msra.mxu0 0.0
    %468 = vmatpush.xpose.msra.mxu0 0.0
    %469 = vmatpush.xpose.msra.mxu0 0.0
    %470 = vmatpush.xpose.msra.mxu0 0.0
    %471 = vmatpush.xpose.msra.mxu0 0.0
    %472 = vmatpush.xpose.msra.mxu0 0.0
    %473 = vmatpush.xpose.msra.mxu0 0.0
    %474 = vmatpush.xpose.msra.mxu0 0.0
    %475 = vmatpush.xpose.msra.mxu0 0.0
    %476 = vmatpush.xpose.msra.mxu0 %v459
    %477 = vmatmul.f32.gmra.mxu0 %v456
    %v478 = vpop.f32.mrf.mxu0
    %v479 = vadd.f32 %v453, %v478
    %480 = vdwg.mxu0
    %v481 = vld [vmem:[#allocation2] sm:$0x1]
    %483 = vset.pattern.permute.xlu0 0
    %484 = vperm.xlu0 %483, %v481
    %v485 = vpop.permute.xlu0 %484
    %v487 = vperm.slane %v485, 0
    %v488 = vadd.f32 %v479, %v487
    %v489 = vxor.u32 %v488, 2147483648
    %v490 = vmul.f32 %v489, 1.442695
    %v491 = vpow.pop %v490
    %v492 = vadd.f32 %v491, 1.0
    %v493 = vrcp.pop %v492
    %v494 = vmul.f32 %v492, %v493
    %v495 = vsub.f32 1.0, %v494
    %v496 = vmul.f32 %v493, %v495
    %v497 = vadd.f32 %v493, %v496
    %vm498 = vweird.f32 %v492
    %vm499 = vweird.f32 %v493
    %vm500 = vmor %vm498, %vm499
    %v501 = vsel %vm500, %v493, %v497
    %v502 = vand.u32 2147483647, %v492
    %vm503 = vcmp.eq.f32.partialorder %v502, 8.507059e+37
    %v504 = vand.u32 %v492, 2147483648
    %v505 = vor.u32 1.1754944e-38, %v504
    %v506 = vsel %vm503, %v505, %v501
    %v507 = vmul.f32 1.0, %v506
    %vm508 = vcmask 57344
    %509 = vst.msk [vmem:[#allocation9] sm:$0x1] %vm508, %v507
    // Predicated region
    $region62: #{tpu_custom_call.1} parent=1 // pred_check
      _
    $region63: #{tpu_custom_call.1} parent=1 // pred_check_branch
      %511 = sbr.rel (0) target = $region65
    $region64: #{tpu_custom_call.1} parent=1 // pred_region
      %513 = vsyncadd [#allocation5], 0
      %s515 = sshll.u32 [#allocation9], 4
      %s516 = int_to_ptr.vmem [resolvable:$true] %s515
      %s517 = sshll.u32 %s12, 4
      %s518 = int_to_ptr.hbm [resolvable:$true] %s517
      %520 = dma.vmem_to_hbm [thread:$0]  %s516, 16, %s518, [#allocation5]
    $region65: #{tpu_custom_call.1} parent=1 // pred_fallthru
      _
    // Predicated region
    $region66: #{tpu_custom_call.1} parent=1 // pred_check
      _
    $region67: #{tpu_custom_call.1} parent=1 // pred_check_branch
      %522 = sbr.rel (0) target = $region69
    $region68: #{tpu_custom_call.1} parent=1 // pred_region
      %524 = dma.done [#allocation5], 16
    $region69: #{tpu_custom_call.1} parent=1 // pred_fallthru
      _
    %525 = vsyncpa [#allocation4], 1
    %526 = vsyncpa [#allocation7], 1
    %527 = vsyncpa [#allocation5], 1

</llo_original>
